<compile_context>
chip_gen: v7x
topology: tpu7x:2x2x1
jax: 0.10.0
libtpu: 0.0.40
codegen_flags: <defaults>
</compile_context>

<pallas_src>
import functools

import jax
import jax.numpy as jnp
from jax.experimental import pallas as pl
from jax.experimental.pallas import tpu as pltpu


def _fourier_pe_kernel(x_ref, wt_ref, out_ref):
    # x_ref:   (TR, M)          flattened position rows (tile)
    # wt_ref:  (M, F_dim)       Wr.T with columns repeat-interleaved (x2)
    # out_ref: (2, TR, F_dim)   [0] = cos branch, [1] = sin branch
    p = jnp.dot(x_ref[...], wt_ref[...], preferred_element_type=jnp.float32)
    out_ref[0] = jnp.cos(p).astype(out_ref.dtype)
    out_ref[1] = jnp.sin(p).astype(out_ref.dtype)


@functools.partial(jax.jit, static_argnames=("tile_rows",))
def learnable_fourier_pe(x, wr_weight, *, tile_rows=2048):
    """x: (B, N, M).  wr_weight: (F_half, M) (torch nn.Linear weight layout).

    Returns emb of shape (2, B, 1, N, F_dim) matching the PyTorch module.
    """
    B, N, M = x.shape
    f_half = wr_weight.shape[0]
    F_dim = 2 * f_half
    R = B * N
    out_dtype = x.dtype  # keep f32 semantics; bf16 output is an easy swap if
                         # downstream tolerates it (halves dominant HBM writes)

    x2d = x.reshape(R, M)                                     # metadata-only
    # Tiny parameter-setup glue in plain JAX: transpose + repeat-interleave.
    wt_rep = jnp.repeat(wr_weight.T.astype(x.dtype), 2, axis=1)  # (M, F_dim)

    # Row tile: full-array block for small R, else a multiple of 8 (sublane
    # constraint).  Partial last tiles are handled by the Pallas pipeline.
    if R <= tile_rows:
        TR = R
    else:
        TR = max(8, (min(tile_rows, R) // 8) * 8)
    num_tiles = pl.cdiv(R, TR)

    itemsize = jnp.dtype(x.dtype).itemsize
    out_itemsize = jnp.dtype(out_dtype).itemsize

    cost = pl.CostEstimate(
        flops=2 * R * F_dim * M,
        transcendentals=2 * R * F_dim,
        bytes_accessed=(R * M + M * F_dim) * itemsize
        + 2 * R * F_dim * out_itemsize,
    )

    # Double-buffered per-tile VMEM footprint (lane-padded to 128, sublane to 8).
    def _pad(a, b):
        return -(-a // b) * b

    in_tile = _pad(TR, 8) * _pad(M, 128) * itemsize
    w_tile = _pad(M, 8) * _pad(F_dim, 128) * itemsize
    out_tile = 2 * _pad(TR, 8) * _pad(F_dim, 128) * out_itemsize
    vmem_bytes = 2 * (in_tile + w_tile + out_tile) + (2 << 20)
    vmem_bytes = int(min(max(vmem_bytes, 16 << 20), 64 << 20))

    out = pl.pallas_call(
        _fourier_pe_kernel,
        out_shape=jax.ShapeDtypeStruct((2, R, F_dim), out_dtype),
        grid_spec=pltpu.PrefetchScalarGridSpec(
            num_scalar_prefetch=0,
            grid=(num_tiles,),
            in_specs=[
                pl.BlockSpec((TR, M), lambda i: (i, 0)),        # row tile
                pl.BlockSpec((M, F_dim), lambda i: (0, 0)),     # resident weight
            ],
            out_specs=pl.BlockSpec((2, TR, F_dim), lambda i: (0, i, 0)),
        ),
        compiler_params=pltpu.CompilerParams(
            dimension_semantics=("parallel",),   # lets v7x shard rows over 2 TCs
            vmem_limit_bytes=vmem_bytes,
        ),
        cost_estimate=cost,
    )(x2d, wt_rep)

    # (2, R, F_dim) -> (2, B, N, F_dim) -> unsqueeze(-3): metadata-only.
    emb = out.reshape(2, B, N, F_dim)[:, :, None, :, :]
    return emb


def _reference(x, wr_weight):
    """Pure-JAX reference with the literal torch op order."""
    proj = jnp.einsum("bnm,fm->bnf", x, wr_weight)
    cos, sin = jnp.cos(proj), jnp.sin(proj)
    emb = jnp.stack([cos, sin], axis=0)[:, :, None, :, :]
    return jnp.repeat(emb, 2, axis=-1)


if __name__ == "__main__":
    # Module config: M=4 coords, dim=32 (=> F_dim=32, F_half=16), gamma=1.0
    M = 4
    dim = 32
    gamma = 1.0
    f_half = dim // 2

    key = jax.random.PRNGKey(0)
    k_w, k_x1, k_x2 = jax.random.split(key, 3)

    # nn.init.normal_(Wr.weight, mean=0, std=gamma ** -2); weight shape (F_half, M)
    wr_weight = (gamma ** (-2)) * jax.random.normal(
        k_w, (f_half, M), dtype=jnp.float32
    )

    # Case 1: small (single full-array tile): batch=2, tokens=8, coord-dim 4.
    B1, N1 = 2, 8
    x1 = jax.random.normal(k_x1, (B1, N1, M), dtype=jnp.float32)
    out1 = jax.block_until_ready(learnable_fourier_pe(x1, wr_weight))
    ref1 = jax.block_until_ready(_reference(x1, wr_weight))
    assert out1.shape == (2, B1, 1, N1, dim), out1.shape
    assert jnp.allclose(out1, ref1, atol=1e-5, rtol=1e-5), float(
        jnp.max(jnp.abs(out1 - ref1))
    )

    # Case 2: exercises the multi-tile + partial-last-block path
    # (R = 2*520 = 1040 rows, tile_rows=256 -> 5 tiles, last one ragged).
    B2, N2 = 2, 520
    x2 = jax.random.normal(k_x2, (B2, N2, M), dtype=jnp.float32)
    out2 = jax.block_until_ready(
        learnable_fourier_pe(x2, wr_weight, tile_rows=256)
    )
    ref2 = jax.block_until_ready(_reference(x2, wr_weight))
    assert out2.shape == (2, B2, 1, N2, dim), out2.shape
    assert jnp.allclose(out2, ref2, atol=1e-5, rtol=1e-5), float(
        jnp.max(jnp.abs(out2 - ref2))
    )

    print("KERNEL_OK")
</pallas_src>

<mosaic_0001>
module attributes {stable_mosaic.version = 11 : i64} {
  func.func @_fourier_pe_kernel(%arg0: i32, %arg1: memref<16x4xf32, #tpu.memory_space<vmem>>, %arg2: memref<4x32xf32, #tpu.memory_space<vmem>>, %arg3: memref<2x16x32xf32, #tpu.memory_space<vmem>>) attributes {dimension_semantics = [#tpu.dimension_semantics<parallel>], iteration_bounds = array<i64: 1>, scalar_prefetch = 0 : i64, scratch_operands = 0 : i64, tpu.core_type = #tpu.core_type<tc>, window_params = [{transform_indices = @transform_0, window_bounds = array<i64: 16, 4>}, {pipeline_mode = #tpu.pipeline_mode<synchronous>, transform_indices = @transform_1, window_bounds = array<i64: 4, 32>}, {transform_indices = @transform_2, window_bounds = array<i64: 2, 16, 32>}]} {
    %c0 = arith.constant 0 : index
    %c0_0 = arith.constant 0 : index
    %0 = vector.load %arg1[%c0, %c0_0] : memref<16x4xf32, #tpu.memory_space<vmem>>, vector<16x4xf32>
    %c0_1 = arith.constant 0 : index
    %c0_2 = arith.constant 0 : index
    %1 = vector.load %arg2[%c0_1, %c0_2] : memref<4x32xf32, #tpu.memory_space<vmem>>, vector<4x32xf32>
    %cst = arith.constant dense<0.000000e+00> : vector<16x32xf32>
    %2 = tpu.matmul %0, %1, %cst {dimension_numbers = #tpu.dot_dimension_numbers<[1], [0], [0], [1], [0, 0, 1, 1], [], []>} : vector<16x4xf32>, vector<4x32xf32>, vector<16x32xf32> -> vector<16x32xf32>
    %3 = math.cos %2 : vector<16x32xf32>
    %c0_3 = arith.constant 0 : index
    %c0_4 = arith.constant 0 : index
    %c0_5 = arith.constant 0 : index
    %4 = vector.load %arg3[%c0_3, %c0_4, %c0_5] : memref<2x16x32xf32, #tpu.memory_space<vmem>>, vector<1x16x32xf32>
    %5 = vector.shape_cast %4 : vector<1x16x32xf32> to vector<16x32xf32>
    %6 = vector.shape_cast %3 : vector<16x32xf32> to vector<1x16x32xf32>
    tpu.vector_store %arg3[%c0_3, %c0_4, %c0_5], %6 {strides = array<i32>} : memref<2x16x32xf32, #tpu.memory_space<vmem>>, vector<1x16x32xf32>,
    %7 = math.sin %2 : vector<16x32xf32>
    %c1 = arith.constant 1 : index
    %c0_6 = arith.constant 0 : index
    %c0_7 = arith.constant 0 : index
    %8 = vector.load %arg3[%c1, %c0_6, %c0_7] : memref<2x16x32xf32, #tpu.memory_space<vmem>>, vector<1x16x32xf32>
    %9 = vector.shape_cast %8 : vector<1x16x32xf32> to vector<16x32xf32>
    %10 = vector.shape_cast %7 : vector<16x32xf32> to vector<1x16x32xf32>
    tpu.vector_store %arg3[%c1, %c0_6, %c0_7], %10 {strides = array<i32>} : memref<2x16x32xf32, #tpu.memory_space<vmem>>, vector<1x16x32xf32>,
    return
  }
  func.func @transform_0(%arg0: i32) -> (i32, i32) {
    %c0_i32 = arith.constant 0 : i32
    %c0_i32_0 = arith.constant 0 : i32
    return %arg0, %c0_i32 : i32, i32
  }
  func.func @transform_1(%arg0: i32) -> (i32, i32) {
    %c0_i32 = arith.constant 0 : i32
    %c0_i32_0 = arith.constant 0 : i32
    %c0_i32_1 = arith.constant 0 : i32
    return %c0_i32, %c0_i32_0 : i32, i32
  }
  func.func @transform_2(%arg0: i32) -> (i32, i32, i32) {
    %c0_i32 = arith.constant 0 : i32
    %c0_i32_0 = arith.constant 0 : i32
    %c0_i32_1 = arith.constant 0 : i32
    return %c0_i32, %arg0, %c0_i32_0 : i32, i32, i32
  }
}

</mosaic_0001>

<llo_original>
// kernel: learnable_fourier_pe.1
$region0: #{learnable_fourier_pe.1}
  #allocation0 [shape = 'u32[]', space=smem, size = 0x4, offset = 0x4, fixed_abs, tag = 'smem constant byte address 0x4 - core index']
  #allocation1 [shape = 'u32[144,128]{1,0:T(1,128)}', space=vmem, size = 0x12000, scoped, tag = 'internal scratch']
  %s0 = inlined_call_operand.vmem [shape: f32[16,4], index: 0, kind: input, shape index: {}]
  %s1 = inlined_call_operand.vmem [shape: f32[4,32], index: 1, kind: input, shape index: {}]
  %s2 = inlined_call_operand.hbm [shape: f32[2,16,32], index: 2, kind: output, shape index: {}]
  %s3 = sld [smem:[#allocation0]]
  $region18: #{learnable_fourier_pe.1} parent=0
    _
  %s5 = ssub.s32 1, %s3
  %s6 = scalar_select 0, %s5, %s3
  $region1: #{learnable_fourier_pe.1} parent=0
    #allocation2 [shape = 'u8[16384]{0}', space=vmem, size = 0x4000, scoped, tag = 'output window, operand 0, single buffered']
    #allocation3 [shape = 's32[1]{0}', space=sflag, size = 0x4, scoped, tag = 'scoped memory for learnable_fourier_pe.1']
    %7 = vsyncpa [#allocation3], 0
    // Predicated region
    $region2: #{learnable_fourier_pe.1} parent=1 // pred_check
      _
    $region3: #{learnable_fourier_pe.1} parent=1 // pred_check_branch
      %9 = sbr.rel (0) target = $region5
    $region4: #{learnable_fourier_pe.1} parent=1 // pred_region
      _
    $region5: #{learnable_fourier_pe.1} parent=1 // pred_fallthru
      _
    // Predicated region
    $region6: #{learnable_fourier_pe.1} parent=1 // pred_check
      _
    $region7: #{learnable_fourier_pe.1} parent=1 // pred_check_branch
      %11 = sbr.rel (0) target = $region9
    $region8: #{learnable_fourier_pe.1} parent=1 // pred_region
      _
    $region9: #{learnable_fourier_pe.1} parent=1 // pred_fallthru
      _
    %v12 = vld [vmem:[%s0] sm:$0xff]
    %v13 = vld [vmem:[%s0 + $0x8] sm:$0xff]
    %v14 = vld [vmem:[%s1] sm:$0xf]
    %vm15 = vcmask 31744
    %v17 = vsel %vm15, %v12, 0
    %v20 = vsel %vm15, %v13, 0
    %vm22 = vcmask 1043456
    %v24 = vsel %vm22, %v14, 0
    %26 = vmatprep.subr.mxu0 0.0
    %27 = vmatpush1.msra.mxu0 %v24
    %28 = vmatprep.subr.mxu0 0.0
    %29 = vmatpush1.msra.mxu0 0.0
    %30 = vmatprep.subr.mxu0 0.0
    %31 = vmatpush1.msra.mxu0 0.0
    %32 = vmatprep.subr.mxu0 0.0
    %33 = vmatpush1.msra.mxu0 0.0
    %34 = vmatprep.subr.mxu0 0.0
    %35 = vmatpush1.msra.mxu0 0.0
    %36 = vmatprep.subr.mxu0 0.0
    %37 = vmatpush1.msra.mxu0 0.0
    %38 = vmatprep.subr.mxu0 0.0
    %39 = vmatpush1.msra.mxu0 0.0
    %40 = vmatprep.subr.mxu0 0.0
    %41 = vmatpush1.msra.mxu0 0.0
    %42 = vmatprep.subr.mxu0 0.0
    %43 = vmatpush1.msra.mxu0 0.0
    %44 = vmatprep.subr.mxu0 0.0
    %45 = vmatpush1.msra.mxu0 0.0
    %46 = vmatprep.subr.mxu0 0.0
    %47 = vmatpush1.msra.mxu0 0.0
    %48 = vmatprep.subr.mxu0 0.0
    %49 = vmatpush1.msra.mxu0 0.0
    %50 = vmatprep.subr.mxu0 0.0
    %51 = vmatpush1.msra.mxu0 0.0
    %52 = vmatprep.subr.mxu0 0.0
    %53 = vmatpush1.msra.mxu0 0.0
    %54 = vmatprep.subr.mxu0 0.0
    %55 = vmatpush1.msra.mxu0 0.0
    %56 = vmatprep.subr.mxu0 0.0
    %57 = vmatpush1.msra.mxu0 0.0
    %58 = vmatprep.subr.mxu0 0.0
    %59 = vmatpush1.msra.mxu0 0.0
    %60 = vmatprep.subr.mxu0 0.0
    %61 = vmatpush1.msra.mxu0 0.0
    %62 = vmatprep.subr.mxu0 0.0
    %63 = vmatpush1.msra.mxu0 0.0
    %64 = vmatprep.subr.mxu0 0.0
    %65 = vmatpush1.msra.mxu0 0.0
    %66 = vmatprep.subr.mxu0 0.0
    %67 = vmatpush1.msra.mxu0 0.0
    %68 = vmatprep.subr.mxu0 0.0
    %69 = vmatpush1.msra.mxu0 0.0
    %70 = vmatprep.subr.mxu0 0.0
    %71 = vmatpush1.msra.mxu0 0.0
    %72 = vmatprep.subr.mxu0 0.0
    %73 = vmatpush1.msra.mxu0 0.0
    %74 = vmatprep.subr.mxu0 0.0
    %75 = vmatpush1.msra.mxu0 0.0
    %76 = vmatprep.subr.mxu0 0.0
    %77 = vmatpush1.msra.mxu0 0.0
    %78 = vmatprep.subr.mxu0 0.0
    %79 = vmatpush1.msra.mxu0 0.0
    %80 = vmatprep.subr.mxu0 0.0
    %81 = vmatpush1.msra.mxu0 0.0
    %82 = vmatprep.subr.mxu0 0.0
    %83 = vmatpush1.msra.mxu0 0.0
    %84 = vmatprep.subr.mxu0 0.0
    %85 = vmatpush1.msra.mxu0 0.0
    %86 = vmatprep.subr.mxu0 0.0
    %87 = vmatpush1.msra.mxu0 0.0
    %88 = vmatprep.subr.mxu0 0.0
    %89 = vmatpush1.msra.mxu0 0.0
    %90 = vmatprep.mubr.f32.mxu0 0.0
    %91 = vmatmul.mubr.f32.gmra.mrb[0].mxu0 %v17
    %v92 = vpop.f32.mrb[0].mxu0
    %v93 = vadd.f32 0.0, %v92
    %v94 = vpop.f32.mrb[0].mxu0
    %95 = vmatprep.mubr.f32.mxu0 0.0
    %96 = vmatmul.mubr.f32.gmra.mrb[0].mxu0 %v20
    %v97 = vpop.f32.mrb[0].mxu0
    %v98 = vadd.f32 0.0, %v97
    %v99 = vpop.f32.mrb[0].mxu0
    %100 = vdwg.mxu0
    %v101 = vand.u32 2147483647, %v93
    %vm102 = vcmp.le.f32.partialorder %v101, 0.7853982
    %vm103 = vcmp.lt.s32.totalorder %v93, 0
    %v104 = vand.u32 %v93, 2139095040
    %v105 = vshrl.u32 %v104, 23
    %v106 = vsub.s32 %v105, 127
    %v107 = vand.u32 2147483647, %v93
    %v108 = vand.u32 %v107, 8388607
    %v109 = vor.u32 %v108, 8388608
    %v110 = vsub.s32 0, %v109
    %v111 = vadd.s32 %v106, 1
    %vm112 = vcmp.gt.s32.totalorder %v111, 0
    %v113 = vsel %vm112, %v111, 0
    %v114 = vshrl.u32 %v113, 5
    %v115 = vand.u32 %v113, 31
    %v116 = vsub.s32 32, %v115
    %v117 = vshrl.u32 683565275, %v116
    %v118 = vshll.u32 683565275, %v115
    %v119 = vshrl.u32 2475754826, %v116
    %v120 = vor.u32 %v118, %v119
    %v121 = vshll.u32 2475754826, %v115
    %v122 = vshrl.u32 2131351028, %v116
    %v123 = vor.u32 %v121, %v122
    %v124 = vshll.u32 2131351028, %v115
    %v125 = vshrl.u32 2102212464, %v116
    %v126 = vor.u32 %v124, %v125
    %v127 = vshll.u32 2102212464, %v115
    %v128 = vshrl.u32 920167782, %v116
    %v129 = vor.u32 %v127, %v128
    %v130 = vshll.u32 920167782, %v115
    %v131 = vshrl.u32 1326507024, %v116
    %v132 = vor.u32 %v130, %v131
    %vm133 = vcmp.lt.s32.totalorder %v114, 1
    %vm134 = vcmp.lt.s32.totalorder %v114, 2
    %vm135 = vcmp.lt.s32.totalorder %v114, 3
    %vm136 = vcmp.lt.s32.totalorder %v114, 4
    %v137 = vsel %vm133, %v117, %v120
    %v138 = vsel %vm136, %v126, 2102212464
    %v139 = vsel %vm135, %v123, %v138
    %v140 = vsel %vm134, %v137, %v139
    %v141 = vsel %vm133, %v120, %v123
    %v142 = vsel %vm136, %v129, 920167782
    %v143 = vsel %vm135, %v126, %v142
    %v144 = vsel %vm134, %v141, %v143
    %v145 = vsel %vm133, %v123, %v126
    %v146 = vsel %vm136, %v132, 1326507024
    %v147 = vsel %vm135, %v129, %v146
    %v148 = vsel %vm134, %v145, %v147
    %v149 = vshll.u32 %v109, 8
    %v150 = vmul.u32.u64.compose %v149, %v148
    %v151 = vextract.low.u32 %v150
    %v152 = vextract.high.u32 %v150
    %v153 = vmul.u32.u64.compose %v149, %v144
    %v154 = vextract.low.u32 %v153
    %v155 = vextract.high.u32 %v153
    %v156 = vmul.u32 %v149, %v140
    %v157 = vadd.s32 %v152, %v154
    %vm158 = vc.u32 %v152, %v154
    %v159 = vadd.s32 %v155, 1
    %v160 = vsel %vm158, %v159, %v155
    %v161 = vadd.s32 %v156, %v160
    %v162 = vadd.s32 %v161, 536870912
    %v163 = vshrl.u32 %v162, 30
    %v164 = vshll.u32 %v163, 30
    %v165 = vsub.s32 %v161, %v164
    %vm166 = vcmp.lt.s32.totalorder %v165, 0
    %v167 = vsub.s32 0, %v165
    %v168 = vsel %vm166, %v167, %v165
    %v169 = vclz %v168
    %v170 = vsub.s32 %v169, 2
    %vm171 = vcmp.gt.s32.totalorder 0, %v170
    %v172 = vsel %vm171, 0, %v170
    %v173 = vsub.s32 32, %v172
    %v174 = vshll.u32 %v165, %v172
    %v175 = vshrl.u32 %v157, %v173
    %v176 = vor.u32 %v174, %v175
    %v177 = vsub.s32 4294967266, %v172
    %v178 = vadd.s32 %v177, 127
    %v179 = vshll.u32 %v178, 23
    %v180 = vor.u32 4788187, %v179
    %v181 = vand.u32 2147483647, %v180
    %v183 = vcvt.s32.f32 %v176
    %v184 = vmul.f32 %v183, %v181
    %v185 = vxor.u32 %v184, 2147483648
    %v186 = vsel %vm103, %v185, %v184
    %v187 = vsub.s32 4, %v163
    %v188 = vsel %vm103, %v187, %v163
    %v189 = vsel %vm102, %v93, %v186
    %v190 = vsel %vm102, 0, %v188
    %v191 = vcosq.f32.pop %v189
    %v192 = vsinq.f32.pop %v189
    %vm193 = vweird.f32 %v93
    %v194 = vand.u32 %v190, 3
    %vm195 = vcmp.lt.s32.totalorder %v194, 2
    %vm196 = vcmp.eq.s32.totalorder %v194, 0
    %v197 = vxor.u32 %v192, 2147483648
    %v198 = vsel %vm196, %v191, %v197
    %vm199 = vcmp.eq.s32.totalorder %v194, 2
    %v200 = vxor.u32 %v191, 2147483648
    %v201 = vsel %vm199, %v200, %v192
    %v202 = vsel %vm195, %v198, %v201
    %v203 = vsel %vm193, nan, %v202
    %v204 = vand.u32 2147483647, %v98
    %vm205 = vcmp.le.f32.partialorder %v204, 0.7853982
    %vm206 = vcmp.lt.s32.totalorder %v98, 0
    %v207 = vand.u32 %v98, 2139095040
    %v208 = vshrl.u32 %v207, 23
    %v209 = vsub.s32 %v208, 127
    %v210 = vand.u32 2147483647, %v98
    %v211 = vand.u32 %v210, 8388607
    %v212 = vor.u32 %v211, 8388608
    %v213 = vsub.s32 0, %v212
    %v214 = vadd.s32 %v209, 1
    %vm215 = vcmp.gt.s32.totalorder %v214, 0
    %v216 = vsel %vm215, %v214, 0
    %v217 = vshrl.u32 %v216, 5
    %v218 = vand.u32 %v216, 31
    %v219 = vsub.s32 32, %v218
    %v220 = vshrl.u32 683565275, %v219
    %v221 = vshll.u32 683565275, %v218
    %v222 = vshrl.u32 2475754826, %v219
    %v223 = vor.u32 %v221, %v222
    %v224 = vshll.u32 2475754826, %v218
    %v225 = vshrl.u32 2131351028, %v219
    %v226 = vor.u32 %v224, %v225
    %v227 = vshll.u32 2131351028, %v218
    %v228 = vshrl.u32 2102212464, %v219
    %v229 = vor.u32 %v227, %v228
    %v230 = vshll.u32 2102212464, %v218
    %v231 = vshrl.u32 920167782, %v219
    %v232 = vor.u32 %v230, %v231
    %v233 = vshll.u32 920167782, %v218
    %v234 = vshrl.u32 1326507024, %v219
    %v235 = vor.u32 %v233, %v234
    %vm236 = vcmp.lt.s32.totalorder %v217, 1
    %vm237 = vcmp.lt.s32.totalorder %v217, 2
    %vm238 = vcmp.lt.s32.totalorder %v217, 3
    %vm239 = vcmp.lt.s32.totalorder %v217, 4
    %v240 = vsel %vm236, %v220, %v223
    %v241 = vsel %vm239, %v229, 2102212464
    %v242 = vsel %vm238, %v226, %v241
    %v243 = vsel %vm237, %v240, %v242
    %v244 = vsel %vm236, %v223, %v226
    %v245 = vsel %vm239, %v232, 920167782
    %v246 = vsel %vm238, %v229, %v245
    %v247 = vsel %vm237, %v244, %v246
    %v248 = vsel %vm236, %v226, %v229
    %v249 = vsel %vm239, %v235, 1326507024
    %v250 = vsel %vm238, %v232, %v249
    %v251 = vsel %vm237, %v248, %v250
    %v252 = vshll.u32 %v212, 8
    %v253 = vmul.u32.u64.compose %v252, %v251
    %v254 = vextract.low.u32 %v253
    %v255 = vextract.high.u32 %v253
    %v256 = vmul.u32.u64.compose %v252, %v247
    %v257 = vextract.low.u32 %v256
    %v258 = vextract.high.u32 %v256
    %v259 = vmul.u32 %v252, %v243
    %v260 = vadd.s32 %v255, %v257
    %vm261 = vc.u32 %v255, %v257
    %v262 = vadd.s32 %v258, 1
    %v263 = vsel %vm261, %v262, %v258
    %v264 = vadd.s32 %v259, %v263
    %v265 = vadd.s32 %v264, 536870912
    %v266 = vshrl.u32 %v265, 30
    %v267 = vshll.u32 %v266, 30
    %v268 = vsub.s32 %v264, %v267
    %vm269 = vcmp.lt.s32.totalorder %v268, 0
    %v270 = vsub.s32 0, %v268
    %v271 = vsel %vm269, %v270, %v268
    %v272 = vclz %v271
    %v273 = vsub.s32 %v272, 2
    %vm274 = vcmp.gt.s32.totalorder 0, %v273
    %v275 = vsel %vm274, 0, %v273
    %v276 = vsub.s32 32, %v275
    %v277 = vshll.u32 %v268, %v275
    %v278 = vshrl.u32 %v260, %v276
    %v279 = vor.u32 %v277, %v278
    %v280 = vsub.s32 4294967266, %v275
    %v281 = vadd.s32 %v280, 127
    %v282 = vshll.u32 %v281, 23
    %v283 = vor.u32 4788187, %v282
    %v284 = vand.u32 2147483647, %v283
    %v286 = vcvt.s32.f32 %v279
    %v287 = vmul.f32 %v286, %v284
    %v288 = vxor.u32 %v287, 2147483648
    %v289 = vsel %vm206, %v288, %v287
    %v290 = vsub.s32 4, %v266
    %v291 = vsel %vm206, %v290, %v266
    %v292 = vsel %vm205, %v98, %v289
    %v293 = vsel %vm205, 0, %v291
    %v294 = vcosq.f32.pop %v292
    %v295 = vsinq.f32.pop %v292
    %vm296 = vweird.f32 %v98
    %v297 = vand.u32 %v293, 3
    %vm298 = vcmp.lt.s32.totalorder %v297, 2
    %vm299 = vcmp.eq.s32.totalorder %v297, 0
    %v300 = vxor.u32 %v295, 2147483648
    %v301 = vsel %vm299, %v294, %v300
    %vm302 = vcmp.eq.s32.totalorder %v297, 2
    %v303 = vxor.u32 %v294, 2147483648
    %v304 = vsel %vm302, %v303, %v295
    %v305 = vsel %vm298, %v301, %v304
    %v306 = vsel %vm296, nan, %v305
    %vm307 = vcmask 261120
    %308 = vst.msk [vmem:[#allocation2] sm:$0xff] %vm307, %v203
    %309 = vst.msk [vmem:[#allocation2 + $0x8] sm:$0xff] %vm307, %v306
    %v310 = vand.u32 2147483647, %v93
    %vm311 = vcmp.le.f32.partialorder %v310, 0.7853982
    %vm312 = vcmp.lt.s32.totalorder %v93, 0
    %v313 = vand.u32 %v93, 2139095040
    %v314 = vshrl.u32 %v313, 23
    %v315 = vsub.s32 %v314, 127
    %v316 = vand.u32 2147483647, %v93
    %v317 = vand.u32 %v316, 8388607
    %v318 = vor.u32 %v317, 8388608
    %v319 = vsub.s32 0, %v318
    %v320 = vadd.s32 %v315, 1
    %vm321 = vcmp.gt.s32.totalorder %v320, 0
    %v322 = vsel %vm321, %v320, 0
    %v323 = vshrl.u32 %v322, 5
    %v324 = vand.u32 %v322, 31
    %v325 = vsub.s32 32, %v324
    %v326 = vshrl.u32 683565275, %v325
    %v327 = vshll.u32 683565275, %v324
    %v328 = vshrl.u32 2475754826, %v325
    %v329 = vor.u32 %v327, %v328
    %v330 = vshll.u32 2475754826, %v324
    %v331 = vshrl.u32 2131351028, %v325
    %v332 = vor.u32 %v330, %v331
    %v333 = vshll.u32 2131351028, %v324
    %v334 = vshrl.u32 2102212464, %v325
    %v335 = vor.u32 %v333, %v334
    %v336 = vshll.u32 2102212464, %v324
    %v337 = vshrl.u32 920167782, %v325
    %v338 = vor.u32 %v336, %v337
    %v339 = vshll.u32 920167782, %v324
    %v340 = vshrl.u32 1326507024, %v325
    %v341 = vor.u32 %v339, %v340
    %vm342 = vcmp.lt.s32.totalorder %v323, 1
    %vm343 = vcmp.lt.s32.totalorder %v323, 2
    %vm344 = vcmp.lt.s32.totalorder %v323, 3
    %vm345 = vcmp.lt.s32.totalorder %v323, 4
    %v346 = vsel %vm342, %v326, %v329
    %v347 = vsel %vm345, %v335, 2102212464
    %v348 = vsel %vm344, %v332, %v347
    %v349 = vsel %vm343, %v346, %v348
    %v350 = vsel %vm342, %v329, %v332
    %v351 = vsel %vm345, %v338, 920167782
    %v352 = vsel %vm344, %v335, %v351
    %v353 = vsel %vm343, %v350, %v352
    %v354 = vsel %vm342, %v332, %v335
    %v355 = vsel %vm345, %v341, 1326507024
    %v356 = vsel %vm344, %v338, %v355
    %v357 = vsel %vm343, %v354, %v356
    %v358 = vshll.u32 %v318, 8
    %v359 = vmul.u32.u64.compose %v358, %v357
    %v360 = vextract.low.u32 %v359
    %v361 = vextract.high.u32 %v359
    %v362 = vmul.u32.u64.compose %v358, %v353
    %v363 = vextract.low.u32 %v362
    %v364 = vextract.high.u32 %v362
    %v365 = vmul.u32 %v358, %v349
    %v366 = vadd.s32 %v361, %v363
    %vm367 = vc.u32 %v361, %v363
    %v368 = vadd.s32 %v364, 1
    %v369 = vsel %vm367, %v368, %v364
    %v370 = vadd.s32 %v365, %v369
    %v371 = vadd.s32 %v370, 536870912
    %v372 = vshrl.u32 %v371, 30
    %v373 = vshll.u32 %v372, 30
    %v374 = vsub.s32 %v370, %v373
    %vm375 = vcmp.lt.s32.totalorder %v374, 0
    %v376 = vsub.s32 0, %v374
    %v377 = vsel %vm375, %v376, %v374
    %v378 = vclz %v377
    %v379 = vsub.s32 %v378, 2
    %vm380 = vcmp.gt.s32.totalorder 0, %v379
    %v381 = vsel %vm380, 0, %v379
    %v382 = vsub.s32 32, %v381
    %v383 = vshll.u32 %v374, %v381
    %v384 = vshrl.u32 %v366, %v382
    %v385 = vor.u32 %v383, %v384
    %v386 = vsub.s32 4294967266, %v381
    %v387 = vadd.s32 %v386, 127
    %v388 = vshll.u32 %v387, 23
    %v389 = vor.u32 4788187, %v388
    %v390 = vand.u32 2147483647, %v389
    %v392 = vcvt.s32.f32 %v385
    %v393 = vmul.f32 %v392, %v390
    %v394 = vxor.u32 %v393, 2147483648
    %v395 = vsel %vm312, %v394, %v393
    %v396 = vsub.s32 4, %v372
    %v397 = vsel %vm312, %v396, %v372
    %v398 = vsel %vm311, %v93, %v395
    %v399 = vsel %vm311, 0, %v397
    %v400 = vcosq.f32.pop %v398
    %v401 = vsinq.f32.pop %v398
    %vm402 = vweird.f32 %v93
    %v403 = vadd.s32 %v399, 3
    %v404 = vand.u32 %v403, 3
    %vm405 = vcmp.lt.s32.totalorder %v404, 2
    %vm406 = vcmp.eq.s32.totalorder %v404, 0
    %v407 = vxor.u32 %v401, 2147483648
    %v408 = vsel %vm406, %v400, %v407
    %vm409 = vcmp.eq.s32.totalorder %v404, 2
    %v410 = vxor.u32 %v400, 2147483648
    %v411 = vsel %vm409, %v410, %v401
    %v412 = vsel %vm405, %v408, %v411
    %v413 = vsel %vm402, nan, %v412
    %v414 = vand.u32 2147483647, %v98
    %vm415 = vcmp.le.f32.partialorder %v414, 0.7853982
    %vm416 = vcmp.lt.s32.totalorder %v98, 0
    %v417 = vand.u32 %v98, 2139095040
    %v418 = vshrl.u32 %v417, 23
    %v419 = vsub.s32 %v418, 127
    %v420 = vand.u32 2147483647, %v98
    %v421 = vand.u32 %v420, 8388607
    %v422 = vor.u32 %v421, 8388608
    %v423 = vsub.s32 0, %v422
    %v424 = vadd.s32 %v419, 1
    %vm425 = vcmp.gt.s32.totalorder %v424, 0
    %v426 = vsel %vm425, %v424, 0
    %v427 = vshrl.u32 %v426, 5
    %v428 = vand.u32 %v426, 31
    %v429 = vsub.s32 32, %v428
    %v430 = vshrl.u32 683565275, %v429
    %v431 = vshll.u32 683565275, %v428
    %v432 = vshrl.u32 2475754826, %v429
    %v433 = vor.u32 %v431, %v432
    %v434 = vshll.u32 2475754826, %v428
    %v435 = vshrl.u32 2131351028, %v429
    %v436 = vor.u32 %v434, %v435
    %v437 = vshll.u32 2131351028, %v428
    %v438 = vshrl.u32 2102212464, %v429
    %v439 = vor.u32 %v437, %v438
    %v440 = vshll.u32 2102212464, %v428
    %v441 = vshrl.u32 920167782, %v429
    %v442 = vor.u32 %v440, %v441
    %v443 = vshll.u32 920167782, %v428
    %v444 = vshrl.u32 1326507024, %v429
    %v445 = vor.u32 %v443, %v444
    %vm446 = vcmp.lt.s32.totalorder %v427, 1
    %vm447 = vcmp.lt.s32.totalorder %v427, 2
    %vm448 = vcmp.lt.s32.totalorder %v427, 3
    %vm449 = vcmp.lt.s32.totalorder %v427, 4
    %v450 = vsel %vm446, %v430, %v433
    %v451 = vsel %vm449, %v439, 2102212464
    %v452 = vsel %vm448, %v436, %v451
    %v453 = vsel %vm447, %v450, %v452
    %v454 = vsel %vm446, %v433, %v436
    %v455 = vsel %vm449, %v442, 920167782
    %v456 = vsel %vm448, %v439, %v455
    %v457 = vsel %vm447, %v454, %v456
    %v458 = vsel %vm446, %v436, %v439
    %v459 = vsel %vm449, %v445, 1326507024
    %v460 = vsel %vm448, %v442, %v459
    %v461 = vsel %vm447, %v458, %v460
    %v462 = vshll.u32 %v422, 8
    %v463 = vmul.u32.u64.compose %v462, %v461
    %v464 = vextract.low.u32 %v463
    %v465 = vextract.high.u32 %v463
    %v466 = vmul.u32.u64.compose %v462, %v457
    %v467 = vextract.low.u32 %v466
    %v468 = vextract.high.u32 %v466
    %v469 = vmul.u32 %v462, %v453
    %v470 = vadd.s32 %v465, %v467
    %vm471 = vc.u32 %v465, %v467
    %v472 = vadd.s32 %v468, 1
    %v473 = vsel %vm471, %v472, %v468
    %v474 = vadd.s32 %v469, %v473
    %v475 = vadd.s32 %v474, 536870912
    %v476 = vshrl.u32 %v475, 30
    %v477 = vshll.u32 %v476, 30
    %v478 = vsub.s32 %v474, %v477
    %vm479 = vcmp.lt.s32.totalorder %v478, 0
    %v480 = vsub.s32 0, %v478
    %v481 = vsel %vm479, %v480, %v478
    %v482 = vclz %v481
    %v483 = vsub.s32 %v482, 2
    %vm484 = vcmp.gt.s32.totalorder 0, %v483
    %v485 = vsel %vm484, 0, %v483
    %v486 = vsub.s32 32, %v485
    %v487 = vshll.u32 %v478, %v485
    %v488 = vshrl.u32 %v470, %v486
    %v489 = vor.u32 %v487, %v488
    %v490 = vsub.s32 4294967266, %v485
    %v491 = vadd.s32 %v490, 127
    %v492 = vshll.u32 %v491, 23
    %v493 = vor.u32 4788187, %v492
    %v494 = vand.u32 2147483647, %v493
    %v496 = vcvt.s32.f32 %v489
    %v497 = vmul.f32 %v496, %v494
    %v498 = vxor.u32 %v497, 2147483648
    %v499 = vsel %vm416, %v498, %v497
    %v500 = vsub.s32 4, %v476
    %v501 = vsel %vm416, %v500, %v476
    %v502 = vsel %vm415, %v98, %v499
    %v503 = vsel %vm415, 0, %v501
    %v504 = vcosq.f32.pop %v502
    %v505 = vsinq.f32.pop %v502
    %vm506 = vweird.f32 %v98
    %v507 = vadd.s32 %v503, 3
    %v508 = vand.u32 %v507, 3
    %vm509 = vcmp.lt.s32.totalorder %v508, 2
    %vm510 = vcmp.eq.s32.totalorder %v508, 0
    %v511 = vxor.u32 %v505, 2147483648
    %v512 = vsel %vm510, %v504, %v511
    %vm513 = vcmp.eq.s32.totalorder %v508, 2
    %v514 = vxor.u32 %v504, 2147483648
    %v515 = vsel %vm513, %v514, %v505
    %v516 = vsel %vm509, %v512, %v515
    %v517 = vsel %vm506, nan, %v516
    %s518 = scalar_lea.vmem [#allocation2], 16
    %519 = vst.msk [vmem:[%s518] sm:$0xff] %vm307, %v413
    %520 = vst.msk [vmem:[%s518 + $0x8] sm:$0xff] %vm307, %v517
    // Predicated region
    $region10: #{learnable_fourier_pe.1} parent=1 // pred_check
      _
    $region11: #{learnable_fourier_pe.1} parent=1 // pred_check_branch
      %522 = sbr.rel (0) target = $region13
    $region12: #{learnable_fourier_pe.1} parent=1 // pred_region
      %s524 = ssub.s32 512, 512
      %525 = vsyncadd [#allocation3], %s524
      %s526 = sshll.u32 [#allocation2], 4
      %s527 = int_to_ptr.vmem [resolvable:$true] %s526
      %532 = dma.vmem_to_hbm [thread:$0]  %s527, 512, %s2, [#allocation3], 128, 128, 8
    $region13: #{learnable_fourier_pe.1} parent=1 // pred_fallthru
      _
    // Predicated region
    $region14: #{learnable_fourier_pe.1} parent=1 // pred_check
      _
    $region15: #{learnable_fourier_pe.1} parent=1 // pred_check_branch
      %534 = sbr.rel (0) target = $region17
    $region16: #{learnable_fourier_pe.1} parent=1 // pred_region
      %535 = dma.done [#allocation3], 512
    $region17: #{learnable_fourier_pe.1} parent=1 // pred_fallthru
      _
    %536 = vsyncpa [#allocation3], 1

</llo_original>
